<compile_context>
chip_gen: v6e
topology: v6e:2x2x1
jax: 0.10.0
libtpu: 0.0.40
codegen_flags: <defaults>
</compile_context>

<pallas_src>
import math

import jax
import jax.numpy as jnp
from jax.experimental import pallas as pl
from jax.experimental.pallas import tpu as pltpu

N_OBSERVATIONS = 5
N_ACTIONS = 12          # len(bids)
HIDDEN = 128
W3_PAD = 128            # lane-dense padded width of layer-3 weights in VMEM
TILE_B = 2048           # max batch rows per grid step (multiple of 16)


def _bucket_batch(b):
    """Round b up to a power-of-two multiple of 16 (limits recompiles)."""
    n = 16
    while n < b:
        n *= 2
    return n


def _choose_tiling(batch, max_tile):
    b_pad = _bucket_batch(max(batch, 1))
    tb = min(max_tile, b_pad)
    # Prefer >= 2 grid steps so the "parallel" batch axis can shard across the
    # 2 TensorCores on v7x (harmless on single-TC v5e/v6e).
    if b_pad // tb < 2 and b_pad >= 32:
        tb = b_pad // 2
    return tb, b_pad


def dqn_kernel(x_ref, w1_ref, b1_ref, w2_ref, b2_ref, w3_ref, b3_ref, out_ref):
    # Layer 1: Linear(5 -> 128) + ReLU.  bf16 MXU operands, f32 accumulation.
    x = x_ref[...].astype(jnp.bfloat16)          # in-kernel cast, free on VPU
    h1 = jnp.dot(x, w1_ref[...], preferred_element_type=jnp.float32)
    h1 = jnp.maximum(h1 + b1_ref[...], 0.0)
    # Layer 2: Linear(128 -> 128) + ReLU
    h2 = jnp.dot(h1.astype(jnp.bfloat16), w2_ref[...],
                 preferred_element_type=jnp.float32)
    h2 = jnp.maximum(h2 + b2_ref[...], 0.0)
    # Layer 3: Linear(128 -> 128-padded); only the first N_ACTIONS cols are real.
    h3 = jnp.dot(h2.astype(jnp.bfloat16), w3_ref[...],
                 preferred_element_type=jnp.float32)
    y = h3 + b3_ref[...]
    # Narrow store: only the 12 real Q-value columns go back to HBM.
    out_ref[...] = y[:, :N_ACTIONS].astype(out_ref.dtype)


def dqn_forward(x, params, *, tile_b=TILE_B):
    """x: (B, N_OBSERVATIONS) float32 -> (B, N_ACTIONS) float32."""
    w1, b1, w2, b2, w3, b3 = params  # weights bf16, biases f32, layer-3 padded
    B = x.shape[0]

    tb, b_pad = _choose_tiling(B, tile_b)
    if b_pad != B:
        x = jnp.pad(x, ((0, b_pad - B), (0, 0)))

    grid = (b_pad // tb,)
    resident = lambda a: pl.BlockSpec(a.shape, lambda i: (0, 0))

    out = pl.pallas_call(
        dqn_kernel,
        out_shape=jax.ShapeDtypeStruct((b_pad, N_ACTIONS), jnp.float32),
        grid=grid,
        in_specs=[
            pl.BlockSpec((tb, N_OBSERVATIONS), lambda i: (i, 0)),  # x: tiled
            resident(w1), resident(b1),
            resident(w2), resident(b2),
            resident(w3), resident(b3),
        ],
        out_specs=pl.BlockSpec((tb, N_ACTIONS), lambda i: (i, 0)),
        compiler_params=pltpu.CompilerParams(
            dimension_semantics=("parallel",),
            vmem_limit_bytes=32 * 1024 * 1024),
    )(x, w1, b1, w2, b2, w3, b3)

    return out if b_pad == B else out[:B]


# Jitted entry point: fuses pad + pallas_call + row-slice into one XLA program.
dqn_forward_jit = jax.jit(dqn_forward, static_argnames=("tile_b",))


def init_params(key):
    """PyTorch nn.Linear-style U(-1/sqrt(fan_in), 1/sqrt(fan_in)) init.

    Weights are stored (in, out) so the kernel computes x @ W + b (equivalent
    to PyTorch's x @ W.T + b).  Weights are cast to bf16 for the MXU; biases
    stay f32.  Layer 3 is zero-padded from 12 to W3_PAD outputs so the final
    matmul is lane-dense in VMEM; only the first 12 columns are stored.
    """
    def linear(key, fan_in, fan_out):
        kw, kb = jax.random.split(key)
        bound = 1.0 / math.sqrt(fan_in)
        w = jax.random.uniform(kw, (fan_in, fan_out), jnp.float32, -bound, bound)
        b = jax.random.uniform(kb, (1, fan_out), jnp.float32, -bound, bound)
        return w, b

    k1, k2, k3 = jax.random.split(key, 3)
    w1, b1 = linear(k1, N_OBSERVATIONS, HIDDEN)
    w2, b2 = linear(k2, HIDDEN, HIDDEN)
    w3, b3 = linear(k3, HIDDEN, N_ACTIONS)

    w3p = jnp.pad(w3, ((0, 0), (0, W3_PAD - N_ACTIONS)))
    b3p = jnp.pad(b3, ((0, 0), (0, W3_PAD - N_ACTIONS)))

    return (w1.astype(jnp.bfloat16), b1,
            w2.astype(jnp.bfloat16), b2,
            w3p.astype(jnp.bfloat16), b3p)


def _reference(x, params):
    """Plain-JAX reference with the same bf16-operand / f32-accum math."""
    w1, b1, w2, b2, w3, b3 = params
    xb = x.astype(jnp.bfloat16)
    h = jnp.maximum(
        jnp.dot(xb, w1, preferred_element_type=jnp.float32) + b1, 0.0)
    h = jnp.maximum(
        jnp.dot(h.astype(jnp.bfloat16), w2,
                preferred_element_type=jnp.float32) + b2, 0.0)
    out = jnp.dot(h.astype(jnp.bfloat16), w3,
                  preferred_element_type=jnp.float32) + b3
    return out[:, :N_ACTIONS]


if __name__ == "__main__":
    key = jax.random.PRNGKey(0)
    kparams, kx1, kx2 = jax.random.split(key, 3)
    params = init_params(kparams)

    # Small batch (single tile, exercises batch bucketing 8 -> 16).
    B1 = 8
    x1 = jax.random.normal(kx1, (B1, N_OBSERVATIONS), dtype=jnp.float32)
    out1 = jax.block_until_ready(dqn_forward_jit(x1, params))
    ref1 = _reference(x1, params)
    assert out1.shape == (B1, N_ACTIONS)
    assert jnp.allclose(out1, ref1, atol=2e-3, rtol=2e-3), (
        float(jnp.max(jnp.abs(out1 - ref1))))

    # Larger batch (bucketed 300 -> 512, 2 grid steps of 256 rows each).
    B2 = 300
    x2 = jax.random.normal(kx2, (B2, N_OBSERVATIONS), dtype=jnp.float32)
    out2 = jax.block_until_ready(dqn_forward_jit(x2, params))
    ref2 = _reference(x2, params)
    assert out2.shape == (B2, N_ACTIONS)
    assert jnp.allclose(out2, ref2, atol=2e-3, rtol=2e-3), (
        float(jnp.max(jnp.abs(out2 - ref2))))

    # Loose sanity check against the exact-f32 PyTorch-equivalent math
    # (differences are only bf16 rounding of the matmul operands).
    w1f = params[0].astype(jnp.float32)
    w2f = params[2].astype(jnp.float32)
    w3f = params[4].astype(jnp.float32)[:, :N_ACTIONS]
    h = jnp.maximum(x1 @ w1f + params[1], 0.0)
    h = jnp.maximum(h @ w2f + params[3], 0.0)
    ref_f32 = h @ w3f + params[5][:, :N_ACTIONS]
    assert jnp.allclose(out1, ref_f32, atol=5e-2, rtol=5e-2)

    print("KERNEL_OK")
</pallas_src>

<mosaic_0001>
module attributes {stable_mosaic.version = 11 : i64} {
  func.func @dqn_kernel(%arg0: i32, %arg1: memref<16x5xf32, #tpu.memory_space<vmem>>, %arg2: memref<5x128xbf16, #tpu.memory_space<vmem>>, %arg3: memref<1x128xf32, #tpu.memory_space<vmem>>, %arg4: memref<128x128xbf16, #tpu.memory_space<vmem>>, %arg5: memref<1x128xf32, #tpu.memory_space<vmem>>, %arg6: memref<128x128xbf16, #tpu.memory_space<vmem>>, %arg7: memref<1x128xf32, #tpu.memory_space<vmem>>, %arg8: memref<16x12xf32, #tpu.memory_space<vmem>>) attributes {dimension_semantics = [#tpu.dimension_semantics<parallel>], iteration_bounds = array<i64: 1>, scalar_prefetch = 0 : i64, scratch_operands = 0 : i64, tpu.core_type = #tpu.core_type<tc>, window_params = [{transform_indices = @transform_0, window_bounds = array<i64: 16, 5>}, {pipeline_mode = #tpu.pipeline_mode<synchronous>, transform_indices = @transform_1, window_bounds = array<i64: 5, 128>}, {pipeline_mode = #tpu.pipeline_mode<synchronous>, transform_indices = @transform_2, window_bounds = array<i64: 1, 128>}, {pipeline_mode = #tpu.pipeline_mode<synchronous>, transform_indices = @transform_3, window_bounds = array<i64: 128, 128>}, {pipeline_mode = #tpu.pipeline_mode<synchronous>, transform_indices = @transform_4, window_bounds = array<i64: 1, 128>}, {pipeline_mode = #tpu.pipeline_mode<synchronous>, transform_indices = @transform_5, window_bounds = array<i64: 128, 128>}, {pipeline_mode = #tpu.pipeline_mode<synchronous>, transform_indices = @transform_6, window_bounds = array<i64: 1, 128>}, {transform_indices = @transform_7, window_bounds = array<i64: 16, 12>}]} {
    %c0 = arith.constant 0 : index
    %c0_0 = arith.constant 0 : index
    %0 = vector.load %arg1[%c0, %c0_0] : memref<16x5xf32, #tpu.memory_space<vmem>>, vector<16x5xf32>
    %1 = arith.truncf %0 : vector<16x5xf32> to vector<16x5xbf16>
    %c0_1 = arith.constant 0 : index
    %c0_2 = arith.constant 0 : index
    %2 = vector.load %arg2[%c0_1, %c0_2] : memref<5x128xbf16, #tpu.memory_space<vmem>>, vector<5x128xbf16>
    %cst = arith.constant dense<0.000000e+00> : vector<16x128xf32>
    %3 = tpu.matmul %1, %2, %cst {dimension_numbers = #tpu.dot_dimension_numbers<[1], [0], [0], [1], [0, 0, 1, 1], [], []>} : vector<16x5xbf16>, vector<5x128xbf16>, vector<16x128xf32> -> vector<16x128xf32>
    %c0_3 = arith.constant 0 : index
    %c0_4 = arith.constant 0 : index
    %4 = vector.load %arg3[%c0_3, %c0_4] : memref<1x128xf32, #tpu.memory_space<vmem>>, vector<1x128xf32>
    %5 = vector.broadcast %4 : vector<1x128xf32> to vector<16x128xf32>
    %6 = arith.addf %3, %5 : vector<16x128xf32>
    %cst_5 = arith.constant 0.000000e+00 : f32
    %7 = vector.broadcast %cst_5 : f32 to vector<16x128xf32>
    %8 = arith.maximumf %6, %7 : vector<16x128xf32>
    %9 = arith.truncf %8 : vector<16x128xf32> to vector<16x128xbf16>
    %c0_6 = arith.constant 0 : index
    %c0_7 = arith.constant 0 : index
    %10 = vector.load %arg4[%c0_6, %c0_7] : memref<128x128xbf16, #tpu.memory_space<vmem>>, vector<128x128xbf16>
    %cst_8 = arith.constant dense<0.000000e+00> : vector<16x128xf32>
    %11 = tpu.matmul %9, %10, %cst_8 {dimension_numbers = #tpu.dot_dimension_numbers<[1], [0], [0], [1], [0, 0, 1, 1], [], []>} : vector<16x128xbf16>, vector<128x128xbf16>, vector<16x128xf32> -> vector<16x128xf32>
    %c0_9 = arith.constant 0 : index
    %c0_10 = arith.constant 0 : index
    %12 = vector.load %arg5[%c0_9, %c0_10] : memref<1x128xf32, #tpu.memory_space<vmem>>, vector<1x128xf32>
    %13 = vector.broadcast %12 : vector<1x128xf32> to vector<16x128xf32>
    %14 = arith.addf %11, %13 : vector<16x128xf32>
    %cst_11 = arith.constant 0.000000e+00 : f32
    %15 = vector.broadcast %cst_11 : f32 to vector<16x128xf32>
    %16 = arith.maximumf %14, %15 : vector<16x128xf32>
    %17 = arith.truncf %16 : vector<16x128xf32> to vector<16x128xbf16>
    %c0_12 = arith.constant 0 : index
    %c0_13 = arith.constant 0 : index
    %18 = vector.load %arg6[%c0_12, %c0_13] : memref<128x128xbf16, #tpu.memory_space<vmem>>, vector<128x128xbf16>
    %cst_14 = arith.constant dense<0.000000e+00> : vector<16x128xf32>
    %19 = tpu.matmul %17, %18, %cst_14 {dimension_numbers = #tpu.dot_dimension_numbers<[1], [0], [0], [1], [0, 0, 1, 1], [], []>} : vector<16x128xbf16>, vector<128x128xbf16>, vector<16x128xf32> -> vector<16x128xf32>
    %c0_15 = arith.constant 0 : index
    %c0_16 = arith.constant 0 : index
    %20 = vector.load %arg7[%c0_15, %c0_16] : memref<1x128xf32, #tpu.memory_space<vmem>>, vector<1x128xf32>
    %21 = vector.broadcast %20 : vector<1x128xf32> to vector<16x128xf32>
    %22 = arith.addf %19, %21 : vector<16x128xf32>
    %23 = vector.extract_strided_slice %22 {offsets = [0, 0], sizes = [16, 12], strides = [1, 1]} : vector<16x128xf32> to vector<16x12xf32>
    %c0_17 = arith.constant 0 : index
    %c0_18 = arith.constant 0 : index
    %24 = vector.load %arg8[%c0_17, %c0_18] : memref<16x12xf32, #tpu.memory_space<vmem>>, vector<16x12xf32>
    tpu.vector_store %arg8[%c0_17, %c0_18], %23 {strides = array<i32>} : memref<16x12xf32, #tpu.memory_space<vmem>>, vector<16x12xf32>,
    return
  }
  func.func @transform_0(%arg0: i32) -> (i32, i32) {
    %c0_i32 = arith.constant 0 : i32
    %c0_i32_0 = arith.constant 0 : i32
    return %arg0, %c0_i32 : i32, i32
  }
  func.func @transform_1(%arg0: i32) -> (i32, i32) {
    %c0_i32 = arith.constant 0 : i32
    %c0_i32_0 = arith.constant 0 : i32
    %c0_i32_1 = arith.constant 0 : i32
    return %c0_i32, %c0_i32_0 : i32, i32
  }
  func.func @transform_2(%arg0: i32) -> (i32, i32) {
    %c0_i32 = arith.constant 0 : i32
    %c0_i32_0 = arith.constant 0 : i32
    %c0_i32_1 = arith.constant 0 : i32
    return %c0_i32, %c0_i32_0 : i32, i32
  }
  func.func @transform_3(%arg0: i32) -> (i32, i32) {
    %c0_i32 = arith.constant 0 : i32
    %c0_i32_0 = arith.constant 0 : i32
    %c0_i32_1 = arith.constant 0 : i32
    return %c0_i32, %c0_i32_0 : i32, i32
  }
  func.func @transform_4(%arg0: i32) -> (i32, i32) {
    %c0_i32 = arith.constant 0 : i32
    %c0_i32_0 = arith.constant 0 : i32
    %c0_i32_1 = arith.constant 0 : i32
    return %c0_i32, %c0_i32_0 : i32, i32
  }
  func.func @transform_5(%arg0: i32) -> (i32, i32) {
    %c0_i32 = arith.constant 0 : i32
    %c0_i32_0 = arith.constant 0 : i32
    %c0_i32_1 = arith.constant 0 : i32
    return %c0_i32, %c0_i32_0 : i32, i32
  }
  func.func @transform_6(%arg0: i32) -> (i32, i32) {
    %c0_i32 = arith.constant 0 : i32
    %c0_i32_0 = arith.constant 0 : i32
    %c0_i32_1 = arith.constant 0 : i32
    return %c0_i32, %c0_i32_0 : i32, i32
  }
  func.func @transform_7(%arg0: i32) -> (i32, i32) {
    %c0_i32 = arith.constant 0 : i32
    %c0_i32_0 = arith.constant 0 : i32
    return %arg0, %c0_i32 : i32, i32
  }
}

</mosaic_0001>

<llo_original>
// kernel: dqn_forward.1
$region0: #{dqn_forward.1}
  #allocation0 [shape = 'u32[]', space=smem, size = 0x4, offset = 0x4, fixed_abs, tag = 'smem constant byte address 0x4 - core index']
  #allocation1 [shape = 'u32[144,128]{1,0:T(1,128)}', space=vmem, size = 0x12000, scoped, tag = 'internal scratch']
  %s0 = inlined_call_operand.vmem [shape: f32[16,5], index: 0, kind: input, shape index: {}]
  %s1 = inlined_call_operand.vmem [shape: bf16[5,128], index: 1, kind: input, shape index: {}]
  %s2 = inlined_call_operand.vmem [shape: f32[1,128], index: 2, kind: input, shape index: {}]
  %s3 = inlined_call_operand.hbm [shape: bf16[128,128], index: 3, kind: input, shape index: {}]
  %s4 = inlined_call_operand.vmem [shape: f32[1,128], index: 4, kind: input, shape index: {}]
  %s5 = inlined_call_operand.hbm [shape: bf16[128,128], index: 5, kind: input, shape index: {}]
  %s6 = inlined_call_operand.vmem [shape: f32[1,128], index: 6, kind: input, shape index: {}]
  %s7 = inlined_call_operand.vmem [shape: f32[16,12], index: 7, kind: output, shape index: {}]
  %s8 = sld [smem:[#allocation0]]
  $region46: #{dqn_forward.1} parent=0
    _
  %s10 = ssub.s32 1, %s8
  %s11 = scalar_select 0, %s10, %s8
  $region1: #{dqn_forward.1} parent=0
    #allocation2 [shape = 'u8[32768]{0}', space=vmem, size = 0x8000, scoped, tag = 'input window, operand 3, single buffered']
    #allocation3 [shape = 's32[1]{0}', space=sflag, size = 0x4, scoped, tag = 'scoped memory for dqn_forward.1']
    #allocation4 [shape = 'u8[32768]{0}', space=vmem, size = 0x8000, scoped, tag = 'input window, operand 5, single buffered']
    #allocation5 [shape = 's32[1]{0}', space=sflag, size = 0x4, scoped, tag = 'scoped memory for dqn_forward.1']
    %12 = vsyncpa [#allocation3], 0
    %13 = vsyncpa [#allocation5], 0
    // Predicated region
    $region2: #{dqn_forward.1} parent=1 // pred_check
      _
    $region3: #{dqn_forward.1} parent=1 // pred_check_branch
      %15 = sbr.rel (0) target = $region5
    $region4: #{dqn_forward.1} parent=1 // pred_region
      _
    $region5: #{dqn_forward.1} parent=1 // pred_fallthru
      _
    // Predicated region
    $region6: #{dqn_forward.1} parent=1 // pred_check
      _
    $region7: #{dqn_forward.1} parent=1 // pred_check_branch
      %17 = sbr.rel (0) target = $region9
    $region8: #{dqn_forward.1} parent=1 // pred_region
      _
    $region9: #{dqn_forward.1} parent=1 // pred_fallthru
      _
    // Predicated region
    $region10: #{dqn_forward.1} parent=1 // pred_check
      _
    $region11: #{dqn_forward.1} parent=1 // pred_check_branch
      %19 = sbr.rel (0) target = $region13
    $region12: #{dqn_forward.1} parent=1 // pred_region
      _
    $region13: #{dqn_forward.1} parent=1 // pred_fallthru
      _
    // Predicated region
    $region14: #{dqn_forward.1} parent=1 // pred_check
      _
    $region15: #{dqn_forward.1} parent=1 // pred_check_branch
      %21 = sbr.rel (0) target = $region17
    $region16: #{dqn_forward.1} parent=1 // pred_region
      %s23 = ssub.s32 1024, 1024
      %24 = vsyncadd [#allocation3], %s23
      %s25 = sshll.u32 [#allocation2], 4
      %s26 = int_to_ptr.vmem [resolvable:$true] %s25
      %31 = dma.hbm_to_vmem [thread:$0]  %s3, 1024, %s26, [#allocation3], 64, 64, 4
    $region17: #{dqn_forward.1} parent=1 // pred_fallthru
      _
    // Predicated region
    $region18: #{dqn_forward.1} parent=1 // pred_check
      _
    $region19: #{dqn_forward.1} parent=1 // pred_check_branch
      %33 = sbr.rel (0) target = $region21
    $region20: #{dqn_forward.1} parent=1 // pred_region
      _
    $region21: #{dqn_forward.1} parent=1 // pred_fallthru
      _
    // Predicated region
    $region22: #{dqn_forward.1} parent=1 // pred_check
      _
    $region23: #{dqn_forward.1} parent=1 // pred_check_branch
      %35 = sbr.rel (0) target = $region25
    $region24: #{dqn_forward.1} parent=1 // pred_region
      %s37 = ssub.s32 1024, 1024
      %38 = vsyncadd [#allocation5], %s37
      %s39 = sshll.u32 [#allocation4], 4
      %s40 = int_to_ptr.vmem [resolvable:$true] %s39
      %45 = dma.hbm_to_vmem [thread:$0]  %s5, 1024, %s40, [#allocation5], 64, 64, 4
    $region25: #{dqn_forward.1} parent=1 // pred_fallthru
      _
    // Predicated region
    $region26: #{dqn_forward.1} parent=1 // pred_check
      _
    $region27: #{dqn_forward.1} parent=1 // pred_check_branch
      %47 = sbr.rel (0) target = $region29
    $region28: #{dqn_forward.1} parent=1 // pred_region
      _
    $region29: #{dqn_forward.1} parent=1 // pred_fallthru
      _
    // Predicated region
    $region30: #{dqn_forward.1} parent=1 // pred_check
      _
    $region31: #{dqn_forward.1} parent=1 // pred_check_branch
      %49 = sbr.rel (0) target = $region33
    $region32: #{dqn_forward.1} parent=1 // pred_region
      %50 = dma.done [#allocation3], 1024
    $region33: #{dqn_forward.1} parent=1 // pred_fallthru
      _
    // Predicated region
    $region34: #{dqn_forward.1} parent=1 // pred_check
      _
    $region35: #{dqn_forward.1} parent=1 // pred_check_branch
      %52 = sbr.rel (0) target = $region37
    $region36: #{dqn_forward.1} parent=1 // pred_region
      %53 = dma.done [#allocation5], 1024
    $region37: #{dqn_forward.1} parent=1 // pred_fallthru
      _
    %v55 = vld [vmem:[%s0] sm:$0xff]
    %v56 = vld [vmem:[%s0 + $0x8] sm:$0xff]
    %v57 = vpack.c.bf16 %v56, %v55
    %v58 = vld [vmem:[%s1] sm:$0x7]
    %v59 = vld [vmem:[%s2] sm:$0x1]
    %v61 = vlaneseq
    %v62 = vshrl.u32 %v61, 7
    %v63 = vsub.s32 0, %v62
    %v64 = vrot.slane %v59, %v63
    %vm66 = vcmask 39936
    %v68 = vsel %vm66, %v57, 0
    %vm70 = vcmask 1041408
    %vm71 = vcmask 1042432
    %v72 = vsel %vm70, 4294967295, 65535
    %v73 = vsel %vm71, %v72, 0
    %v75 = vand.u32 %v58, %v73
    %77 = vmatprep.subr.bf16.mxu0 0
    %78 = vmatpush1.bf16.msra.mxu0 0
    %79 = vmatprep.subr.bf16.mxu0 0
    %80 = vmatpush1.bf16.msra.mxu0 0
    %81 = vmatprep.subr.bf16.mxu0 0
    %82 = vmatpush1.bf16.msra.mxu0 0
    %83 = vmatprep.subr.bf16.mxu0 0
    %84 = vmatpush1.bf16.msra.mxu0 0
    %85 = vmatprep.subr.bf16.mxu0 0
    %86 = vmatpush1.bf16.msra.mxu0 0
    %87 = vmatprep.subr.bf16.mxu0 0
    %88 = vmatpush1.bf16.msra.mxu0 0
    %89 = vmatprep.subr.bf16.mxu0 0
    %90 = vmatpush1.bf16.msra.mxu0 0
    %91 = vmatprep.subr.bf16.mxu0 0
    %92 = vmatpush1.bf16.msra.mxu0 %v75
    %93 = vmatprep.subr.bf16.mxu0 0
    %94 = vmatpush2.bf16.msra.mxu0 0
    %95 = vmatprep.subr.bf16.mxu0 0
    %96 = vmatpush2.bf16.msra.mxu0 0
    %97 = vmatprep.subr.bf16.mxu0 0
    %98 = vmatpush2.bf16.msra.mxu0 0
    %99 = vmatprep.subr.bf16.mxu0 0
    %100 = vmatpush2.bf16.msra.mxu0 0
    %101 = vmatprep.subr.bf16.mxu0 0
    %102 = vmatpush2.bf16.msra.mxu0 0
    %103 = vmatprep.subr.bf16.mxu0 0
    %104 = vmatpush2.bf16.msra.mxu0 0
    %105 = vmatprep.subr.bf16.mxu0 0
    %106 = vmatpush2.bf16.msra.mxu0 0
    %107 = vmatprep.subr.bf16.mxu0 0
    %108 = vmatpush2.bf16.msra.mxu0 0
    %109 = vmatprep.mubr.bf16.mxu0 0
    %110 = vmatmul.mubr.bf16.gmra.mxu0 %v68
    %v111 = vpop.f32.mrf.mxu0
    %v112 = vadd.f32 %v64, %v111
    %v113 = vpop.f32.mrf.mxu0
    %v114 = vpop.f32.mrf.mxu0
    %v115 = vadd.f32 %v64, %v114
    %v116 = vpop.f32.mrf.mxu0
    %117 = vdwg.mxu0
    %v118 = vmax.f32 %v112, 0.0
    %v119 = vmax.f32 %v115, 0.0
    %v120 = vpack.c.bf16 %v119, %v118
    %v121 = vld [vmem:[#allocation2] sm:$0xf]
    %v122 = vld [vmem:[#allocation2 + $0x4] sm:$0xf]
    %v123 = vld [vmem:[#allocation2 + $0x8] sm:$0xf]
    %v124 = vld [vmem:[#allocation2 + $0xc] sm:$0xf]
    %v125 = vld [vmem:[#allocation2 + $0x10] sm:$0xf]
    %v126 = vld [vmem:[#allocation2 + $0x14] sm:$0xf]
    %v127 = vld [vmem:[#allocation2 + $0x18] sm:$0xf]
    %v128 = vld [vmem:[#allocation2 + $0x1c] sm:$0xf]
    %v129 = vld [vmem:[#allocation2 + $0x20] sm:$0xf]
    %v130 = vld [vmem:[#allocation2 + $0x24] sm:$0xf]
    %v131 = vld [vmem:[#allocation2 + $0x28] sm:$0xf]
    %v132 = vld [vmem:[#allocation2 + $0x2c] sm:$0xf]
    %v133 = vld [vmem:[#allocation2 + $0x30] sm:$0xf]
    %v134 = vld [vmem:[#allocation2 + $0x34] sm:$0xf]
    %v135 = vld [vmem:[#allocation2 + $0x38] sm:$0xf]
    %v136 = vld [vmem:[#allocation2 + $0x3c] sm:$0xf]
    %v137 = vld [vmem:[%s4] sm:$0x1]
    %v139 = vlaneseq
    %v140 = vshrl.u32 %v139, 7
    %v141 = vsub.s32 0, %v140
    %v142 = vrot.slane %v137, %v141
    %v160 = vunpack.c.l.b16 %v121
    %v161 = vunpack.c.l.b16 %v122
    %v162 = vunpack.c.l.b16 %v123
    %v163 = vunpack.c.l.b16 %v124
    %v164 = vunpack.c.l.b16 %v125
    %v165 = vunpack.c.l.b16 %v126
    %v166 = vunpack.c.l.b16 %v127
    %v167 = vunpack.c.l.b16 %v128
    %v168 = vunpack.c.l.b16 %v129
    %v169 = vunpack.c.l.b16 %v130
    %v170 = vunpack.c.l.b16 %v131
    %v171 = vunpack.c.l.b16 %v132
    %v172 = vunpack.c.l.b16 %v133
    %v173 = vunpack.c.l.b16 %v134
    %v174 = vunpack.c.l.b16 %v135
    %v175 = vunpack.c.l.b16 %v136
    %v176 = vpack.c.b16 %v161, %v160
    %v177 = vpack.c.b16 %v163, %v162
    %v178 = vpack.c.b16 %v165, %v164
    %v179 = vpack.c.b16 %v167, %v166
    %v180 = vpack.c.b16 %v169, %v168
    %v181 = vpack.c.b16 %v171, %v170
    %v182 = vpack.c.b16 %v173, %v172
    %v183 = vpack.c.b16 %v175, %v174
    %192 = vmatprep.subr.bf16.mxu0 0
    %193 = vmatpush1.bf16.msra.mxu0 %v183
    %194 = vmatprep.subr.bf16.mxu0 0
    %195 = vmatpush1.bf16.msra.mxu0 %v182
    %196 = vmatprep.subr.bf16.mxu0 0
    %197 = vmatpush1.bf16.msra.mxu0 %v181
    %198 = vmatprep.subr.bf16.mxu0 0
    %199 = vmatpush1.bf16.msra.mxu0 %v180
    %200 = vmatprep.subr.bf16.mxu0 0
    %201 = vmatpush1.bf16.msra.mxu0 %v179
    %202 = vmatprep.subr.bf16.mxu0 0
    %203 = vmatpush1.bf16.msra.mxu0 %v178
    %204 = vmatprep.subr.bf16.mxu0 0
    %205 = vmatpush1.bf16.msra.mxu0 %v177
    %206 = vmatprep.subr.bf16.mxu0 0
    %207 = vmatpush1.bf16.msra.mxu0 %v176
    %208 = vmatprep.subr.bf16.mxu0 0
    %209 = vmatpush2.bf16.msra.mxu0 0
    %210 = vmatprep.subr.bf16.mxu0 0
    %211 = vmatpush2.bf16.msra.mxu0 0
    %212 = vmatprep.subr.bf16.mxu0 0
    %213 = vmatpush2.bf16.msra.mxu0 0
    %214 = vmatprep.subr.bf16.mxu0 0
    %215 = vmatpush2.bf16.msra.mxu0 0
    %216 = vmatprep.subr.bf16.mxu0 0
    %217 = vmatpush2.bf16.msra.mxu0 0
    %218 = vmatprep.subr.bf16.mxu0 0
    %219 = vmatpush2.bf16.msra.mxu0 0
    %220 = vmatprep.subr.bf16.mxu0 0
    %221 = vmatpush2.bf16.msra.mxu0 0
    %222 = vmatprep.subr.bf16.mxu0 0
    %223 = vmatpush2.bf16.msra.mxu0 0
    %224 = vmatprep.mubr.bf16.mxu0 0
    %225 = vmatmul.mubr.bf16.gmra.mxu0 %v120
    %v226 = vpop.f32.mrf.mxu0
    %v227 = vadd.f32 %v142, %v226
    %v228 = vpop.f32.mrf.mxu0
    %v229 = vpop.f32.mrf.mxu0
    %v230 = vadd.f32 %v142, %v229
    %v231 = vpop.f32.mrf.mxu0
    %232 = vdwg.mxu0
    %v233 = vmax.f32 %v227, 0.0
    %v234 = vmax.f32 %v230, 0.0
    %v235 = vpack.c.bf16 %v234, %v233
    %v236 = vld [vmem:[#allocation4] sm:$0xf]
    %v237 = vld [vmem:[#allocation4 + $0x4] sm:$0xf]
    %v238 = vld [vmem:[#allocation4 + $0x8] sm:$0xf]
    %v239 = vld [vmem:[#allocation4 + $0xc] sm:$0xf]
    %v240 = vld [vmem:[#allocation4 + $0x10] sm:$0xf]
    %v241 = vld [vmem:[#allocation4 + $0x14] sm:$0xf]
    %v242 = vld [vmem:[#allocation4 + $0x18] sm:$0xf]
    %v243 = vld [vmem:[#allocation4 + $0x1c] sm:$0xf]
    %v244 = vld [vmem:[#allocation4 + $0x20] sm:$0xf]
    %v245 = vld [vmem:[#allocation4 + $0x24] sm:$0xf]
    %v246 = vld [vmem:[#allocation4 + $0x28] sm:$0xf]
    %v247 = vld [vmem:[#allocation4 + $0x2c] sm:$0xf]
    %v248 = vld [vmem:[#allocation4 + $0x30] sm:$0xf]
    %v249 = vld [vmem:[#allocation4 + $0x34] sm:$0xf]
    %v250 = vld [vmem:[#allocation4 + $0x38] sm:$0xf]
    %v251 = vld [vmem:[#allocation4 + $0x3c] sm:$0xf]
    %v252 = vld [vmem:[%s6] sm:$0x1]
    %v254 = vlaneseq
    %v255 = vshrl.u32 %v254, 7
    %v256 = vsub.s32 0, %v255
    %v257 = vrot.slane %v252, %v256
    %v275 = vunpack.c.l.b16 %v236
    %v276 = vunpack.c.l.b16 %v237
    %v277 = vunpack.c.l.b16 %v238
    %v278 = vunpack.c.l.b16 %v239
    %v279 = vunpack.c.l.b16 %v240
    %v280 = vunpack.c.l.b16 %v241
    %v281 = vunpack.c.l.b16 %v242
    %v282 = vunpack.c.l.b16 %v243
    %v283 = vunpack.c.l.b16 %v244
    %v284 = vunpack.c.l.b16 %v245
    %v285 = vunpack.c.l.b16 %v246
    %v286 = vunpack.c.l.b16 %v247
    %v287 = vunpack.c.l.b16 %v248
    %v288 = vunpack.c.l.b16 %v249
    %v289 = vunpack.c.l.b16 %v250
    %v290 = vunpack.c.l.b16 %v251
    %v291 = vpack.c.b16 %v276, %v275
    %v292 = vpack.c.b16 %v278, %v277
    %v293 = vpack.c.b16 %v280, %v279
    %v294 = vpack.c.b16 %v282, %v281
    %v295 = vpack.c.b16 %v284, %v283
    %v296 = vpack.c.b16 %v286, %v285
    %v297 = vpack.c.b16 %v288, %v287
    %v298 = vpack.c.b16 %v290, %v289
    %307 = vmatprep.subr.bf16.mxu0 0
    %308 = vmatpush1.bf16.msra.mxu0 %v298
    %309 = vmatprep.subr.bf16.mxu0 0
    %310 = vmatpush1.bf16.msra.mxu0 %v297
    %311 = vmatprep.subr.bf16.mxu0 0
    %312 = vmatpush1.bf16.msra.mxu0 %v296
    %313 = vmatprep.subr.bf16.mxu0 0
    %314 = vmatpush1.bf16.msra.mxu0 %v295
    %315 = vmatprep.subr.bf16.mxu0 0
    %316 = vmatpush1.bf16.msra.mxu0 %v294
    %317 = vmatprep.subr.bf16.mxu0 0
    %318 = vmatpush1.bf16.msra.mxu0 %v293
    %319 = vmatprep.subr.bf16.mxu0 0
    %320 = vmatpush1.bf16.msra.mxu0 %v292
    %321 = vmatprep.subr.bf16.mxu0 0
    %322 = vmatpush1.bf16.msra.mxu0 %v291
    %323 = vmatprep.subr.bf16.mxu0 0
    %324 = vmatpush2.bf16.msra.mxu0 0
    %325 = vmatprep.subr.bf16.mxu0 0
    %326 = vmatpush2.bf16.msra.mxu0 0
    %327 = vmatprep.subr.bf16.mxu0 0
    %328 = vmatpush2.bf16.msra.mxu0 0
    %329 = vmatprep.subr.bf16.mxu0 0
    %330 = vmatpush2.bf16.msra.mxu0 0
    %331 = vmatprep.subr.bf16.mxu0 0
    %332 = vmatpush2.bf16.msra.mxu0 0
    %333 = vmatprep.subr.bf16.mxu0 0
    %334 = vmatpush2.bf16.msra.mxu0 0
    %335 = vmatprep.subr.bf16.mxu0 0
    %336 = vmatpush2.bf16.msra.mxu0 0
    %337 = vmatprep.subr.bf16.mxu0 0
    %338 = vmatpush2.bf16.msra.mxu0 0
    %339 = vmatprep.mubr.bf16.mxu0 0
    %340 = vmatmul.mubr.bf16.gmra.mxu0 %v235
    %v341 = vpop.f32.mrf.mxu0
    %v342 = vadd.f32 %v257, %v341
    %v343 = vpop.f32.mrf.mxu0
    %v344 = vpop.f32.mrf.mxu0
    %v345 = vadd.f32 %v257, %v344
    %v346 = vpop.f32.mrf.mxu0
    %347 = vdwg.mxu0
    %vm348 = vcmask 97280
    %349 = vst.msk [vmem:[%s7] sm:$0xff] %vm348, %v342
    %350 = vst.msk [vmem:[%s7 + $0x8] sm:$0xff] %vm348, %v345
    // Predicated region
    $region38: #{dqn_forward.1} parent=1 // pred_check
      _
    $region39: #{dqn_forward.1} parent=1 // pred_check_branch
      %352 = sbr.rel (0) target = $region41
    $region40: #{dqn_forward.1} parent=1 // pred_region
      _
    $region41: #{dqn_forward.1} parent=1 // pred_fallthru
      _
    // Predicated region
    $region42: #{dqn_forward.1} parent=1 // pred_check
      _
    $region43: #{dqn_forward.1} parent=1 // pred_check_branch
      %354 = sbr.rel (0) target = $region45
    $region44: #{dqn_forward.1} parent=1 // pred_region
      _
    $region45: #{dqn_forward.1} parent=1 // pred_fallthru
      _
    %355 = vsyncpa [#allocation3], 1
    %356 = vsyncpa [#allocation5], 1

</llo_original>
